<compile_context>
chip_gen: v7x
topology: tpu7x:2x2x1
jax: 0.10.0
libtpu: 0.0.40
codegen_flags: <defaults>
</compile_context>

<pallas_src>
import jax
import jax.numpy as jnp
from jax.experimental import pallas as pl
from jax.experimental.pallas import tpu as pltpu


def step_detection_kernel(x_ref,
                          w1, b1, w2, b2, w3, b3,
                          w4, b4, w5, b5, w6, b6,
                          o_ref):
    """Fused conv1..conv3 (k=1) + fc1..fc3 chain on one (C, TILE_B) batch tile.

    Activations live as (channels, TILE_B): batch on the lane axis (dense vregs,
    unmasked stores).  Matmuls run in bf16 on the MXU with f32 accumulation; bias add
    and ReLU are done in f32 on the VPU.
    """
    h = x_ref[...].astype(jnp.bfloat16)            # (6, TILE_B)

    def lin_relu(h, w_ref, b_ref):
        # (out, in) @ (in, TILE_B) -> (out, TILE_B), accumulate in f32.
        acc = jnp.dot(w_ref[...], h, preferred_element_type=jnp.float32)
        return jnp.maximum(acc + b_ref[...], 0.0).astype(jnp.bfloat16)

    h = lin_relu(h, w1, b1)                        # conv1 + relu   (32, TILE_B)
    h = lin_relu(h, w2, b2)                        # conv2 + relu   (64, TILE_B)
    h = lin_relu(h, w3, b3)                        # conv3 + relu   (128, TILE_B)
    h = lin_relu(h, w4, b4)                        # fc1   + relu   (64, TILE_B)
    h = lin_relu(h, w5, b5)                        # fc2   + relu   (32, TILE_B)
    out = jnp.dot(w6[...], h, preferred_element_type=jnp.float32) + b6[...]
    o_ref[...] = out.astype(o_ref.dtype)           # (3, TILE_B)


def init_params(key):
    """Deterministic parameters with PyTorch layer shapes.

    Conv1d weights (out, in, 1) are stored squeezed as (out, in); Linear weights are
    already (out, in).  Biases are (out,).  Layers use y = W @ x + b in (C, B) layout.
    """
    dims = [(6, 32), (32, 64), (64, 128), (128, 64), (64, 32), (32, 3)]
    params = []
    for i, (din, dout) in enumerate(dims):
        kw, kb = jax.random.split(jax.random.fold_in(key, i))
        scale = 1.0 / jnp.sqrt(jnp.float32(din))
        w = jax.random.uniform(kw, (dout, din), jnp.float32, -scale, scale)
        b = jax.random.uniform(kb, (dout,), jnp.float32, -scale, scale)
        params.append((w, b))
    return params


def _round_up(n, m):
    return ((n + m - 1) // m) * m


def step_detection_forward(x, params, *, tile_b=1024):
    """x: (B, 6) float32 -> (B, 3) float32 via a batch-tiled Pallas kernel."""
    B, C_in = x.shape
    assert C_in == 6, x.shape
    C_out = params[-1][0].shape[0]                 # 3

    # Tile size: 128-lane multiple, capped at tile_b; pad batch up to a tile multiple.
    tb = min(tile_b, _round_up(max(B, 1), 128))
    B_pad = _round_up(B, tb)
    num_tiles = B_pad // tb

    # Lane-dense layout: (6, B_pad), batch on the lane axis.
    x_t = jnp.pad(x, ((0, B_pad - B), (0, 0))).T   # (6, B_pad)

    flat_args = []
    in_specs = [pl.BlockSpec((C_in, tb), lambda i: (0, i))]
    for w, b in params:
        w_bf16 = w.astype(jnp.bfloat16)            # bf16 weights: half DMA/VMEM, MXU-native
        b_col = b.reshape(-1, 1).astype(jnp.float32)
        flat_args.append(w_bf16)
        flat_args.append(b_col)
        # Constant block index -> weights/biases stay VMEM-resident across the grid.
        in_specs.append(pl.BlockSpec(w_bf16.shape, lambda i: (0, 0)))
        in_specs.append(pl.BlockSpec(b_col.shape, lambda i: (0, 0)))

    out_t = pl.pallas_call(
        step_detection_kernel,
        out_shape=jax.ShapeDtypeStruct((C_out, B_pad), jnp.float32),
        grid=(num_tiles,),
        in_specs=in_specs,
        out_specs=pl.BlockSpec((C_out, tb), lambda i: (0, i)),
        compiler_params=pltpu.CompilerParams(
            dimension_semantics=("parallel",)),    # megacore sharding on v7x
    )(x_t, *flat_args)

    return out_t[:, :B].T                          # (B, 3)


def reference_forward(x, params):
    """Pure-JAX f32 reference (layer math identical to the PyTorch module in eval)."""
    h = x.T                                        # (6, B)
    for i, (w, b) in enumerate(params):
        h = w @ h + b.reshape(-1, 1)
        if i < len(params) - 1:
            h = jnp.maximum(h, 0.0)
    return h.T


def reference_forward_bf16(x, params):
    """Reference that mimics the kernel's bf16-matmul / f32-accumulate numerics."""
    h = x.T.astype(jnp.bfloat16)
    for i, (w, b) in enumerate(params):
        acc = jnp.dot(w.astype(jnp.bfloat16), h,
                      preferred_element_type=jnp.float32) + b.reshape(-1, 1)
        if i < len(params) - 1:
            h = jnp.maximum(acc, 0.0).astype(jnp.bfloat16)
        else:
            h = acc
    return h.T


if __name__ == "__main__":
    key = jax.random.PRNGKey(0)
    k_x, k_p = jax.random.split(key)

    B = 8
    x = jax.random.normal(k_x, (B, 6), dtype=jnp.float32)
    params = init_params(k_p)

    out = step_detection_forward(x, params)
    out = jax.block_until_ready(out)
    assert out.shape == (B, 3), out.shape

    # Tight check against a reference using the same bf16/f32 mixed-precision math.
    ref_bf16 = reference_forward_bf16(x, params)
    assert jnp.allclose(out, ref_bf16, atol=2e-3, rtol=2e-3), "mismatch vs bf16 reference"

    # Loose check against the full-f32 reference (bf16 matmul rounding only).
    ref_f32 = reference_forward(x, params)
    assert jnp.allclose(out, ref_f32, atol=5e-2, rtol=5e-2), "mismatch vs f32 reference"

    # TODO(synk): nn.Dropout(0.5) is modeled as identity (eval semantics); training-mode
    # dropout is intentionally not implemented.
    print("KERNEL_OK")
</pallas_src>

<mosaic_0001>
module attributes {stable_mosaic.version = 11 : i64} {
  func.func @step_detection_kernel(%arg0: i32, %arg1: memref<6x128xf32, #tpu.memory_space<vmem>>, %arg2: memref<32x6xbf16, #tpu.memory_space<vmem>>, %arg3: memref<32x1xf32, #tpu.memory_space<vmem>>, %arg4: memref<64x32xbf16, #tpu.memory_space<vmem>>, %arg5: memref<64x1xf32, #tpu.memory_space<vmem>>, %arg6: memref<128x64xbf16, #tpu.memory_space<vmem>>, %arg7: memref<128x1xf32, #tpu.memory_space<vmem>>, %arg8: memref<64x128xbf16, #tpu.memory_space<vmem>>, %arg9: memref<64x1xf32, #tpu.memory_space<vmem>>, %arg10: memref<32x64xbf16, #tpu.memory_space<vmem>>, %arg11: memref<32x1xf32, #tpu.memory_space<vmem>>, %arg12: memref<3x32xbf16, #tpu.memory_space<vmem>>, %arg13: memref<3x1xf32, #tpu.memory_space<vmem>>, %arg14: memref<3x128xf32, #tpu.memory_space<vmem>>) attributes {dimension_semantics = [#tpu.dimension_semantics<parallel>], iteration_bounds = array<i64: 1>, scalar_prefetch = 0 : i64, scratch_operands = 0 : i64, tpu.core_type = #tpu.core_type<tc>, window_params = [{transform_indices = @transform_0, window_bounds = array<i64: 6, 128>}, {pipeline_mode = #tpu.pipeline_mode<synchronous>, transform_indices = @transform_1, window_bounds = array<i64: 32, 6>}, {pipeline_mode = #tpu.pipeline_mode<synchronous>, transform_indices = @transform_2, window_bounds = array<i64: 32, 1>}, {pipeline_mode = #tpu.pipeline_mode<synchronous>, transform_indices = @transform_3, window_bounds = array<i64: 64, 32>}, {pipeline_mode = #tpu.pipeline_mode<synchronous>, transform_indices = @transform_4, window_bounds = array<i64: 64, 1>}, {pipeline_mode = #tpu.pipeline_mode<synchronous>, transform_indices = @transform_5, window_bounds = array<i64: 128, 64>}, {pipeline_mode = #tpu.pipeline_mode<synchronous>, transform_indices = @transform_6, window_bounds = array<i64: 128, 1>}, {pipeline_mode = #tpu.pipeline_mode<synchronous>, transform_indices = @transform_7, window_bounds = array<i64: 64, 128>}, {pipeline_mode = #tpu.pipeline_mode<synchronous>, transform_indices = @transform_8, window_bounds = array<i64: 64, 1>}, {pipeline_mode = #tpu.pipeline_mode<synchronous>, transform_indices = @transform_9, window_bounds = array<i64: 32, 64>}, {pipeline_mode = #tpu.pipeline_mode<synchronous>, transform_indices = @transform_10, window_bounds = array<i64: 32, 1>}, {pipeline_mode = #tpu.pipeline_mode<synchronous>, transform_indices = @transform_11, window_bounds = array<i64: 3, 32>}, {pipeline_mode = #tpu.pipeline_mode<synchronous>, transform_indices = @transform_12, window_bounds = array<i64: 3, 1>}, {transform_indices = @transform_13, window_bounds = array<i64: 3, 128>}]} {
    %c0 = arith.constant 0 : index
    %c0_0 = arith.constant 0 : index
    %0 = vector.load %arg1[%c0, %c0_0] : memref<6x128xf32, #tpu.memory_space<vmem>>, vector<6x128xf32>
    %1 = arith.truncf %0 : vector<6x128xf32> to vector<6x128xbf16>
    %c0_1 = arith.constant 0 : index
    %c0_2 = arith.constant 0 : index
    %2 = vector.load %arg2[%c0_1, %c0_2] : memref<32x6xbf16, #tpu.memory_space<vmem>>, vector<32x6xbf16>
    %cst = arith.constant dense<0.000000e+00> : vector<32x128xf32>
    %3 = tpu.matmul %2, %1, %cst {dimension_numbers = #tpu.dot_dimension_numbers<[1], [0], [0], [1], [0, 0, 1, 1], [], []>} : vector<32x6xbf16>, vector<6x128xbf16>, vector<32x128xf32> -> vector<32x128xf32>
    %c0_3 = arith.constant 0 : index
    %c0_4 = arith.constant 0 : index
    %4 = vector.load %arg3[%c0_3, %c0_4] : memref<32x1xf32, #tpu.memory_space<vmem>>, vector<32x1xf32>
    %5 = vector.broadcast %4 : vector<32x1xf32> to vector<32x128xf32>
    %6 = arith.addf %3, %5 : vector<32x128xf32>
    %cst_5 = arith.constant 0.000000e+00 : f32
    %7 = vector.broadcast %cst_5 : f32 to vector<32x128xf32>
    %8 = arith.maximumf %6, %7 : vector<32x128xf32>
    %9 = arith.truncf %8 : vector<32x128xf32> to vector<32x128xbf16>
    %c0_6 = arith.constant 0 : index
    %c0_7 = arith.constant 0 : index
    %10 = vector.load %arg4[%c0_6, %c0_7] : memref<64x32xbf16, #tpu.memory_space<vmem>>, vector<64x32xbf16>
    %cst_8 = arith.constant dense<0.000000e+00> : vector<64x128xf32>
    %11 = tpu.matmul %10, %9, %cst_8 {dimension_numbers = #tpu.dot_dimension_numbers<[1], [0], [0], [1], [0, 0, 1, 1], [], []>} : vector<64x32xbf16>, vector<32x128xbf16>, vector<64x128xf32> -> vector<64x128xf32>
    %c0_9 = arith.constant 0 : index
    %c0_10 = arith.constant 0 : index
    %12 = vector.load %arg5[%c0_9, %c0_10] : memref<64x1xf32, #tpu.memory_space<vmem>>, vector<64x1xf32>
    %13 = vector.broadcast %12 : vector<64x1xf32> to vector<64x128xf32>
    %14 = arith.addf %11, %13 : vector<64x128xf32>
    %cst_11 = arith.constant 0.000000e+00 : f32
    %15 = vector.broadcast %cst_11 : f32 to vector<64x128xf32>
    %16 = arith.maximumf %14, %15 : vector<64x128xf32>
    %17 = arith.truncf %16 : vector<64x128xf32> to vector<64x128xbf16>
    %c0_12 = arith.constant 0 : index
    %c0_13 = arith.constant 0 : index
    %18 = vector.load %arg6[%c0_12, %c0_13] : memref<128x64xbf16, #tpu.memory_space<vmem>>, vector<128x64xbf16>
    %cst_14 = arith.constant dense<0.000000e+00> : vector<128x128xf32>
    %19 = tpu.matmul %18, %17, %cst_14 {dimension_numbers = #tpu.dot_dimension_numbers<[1], [0], [0], [1], [0, 0, 1, 1], [], []>} : vector<128x64xbf16>, vector<64x128xbf16>, vector<128x128xf32> -> vector<128x128xf32>
    %c0_15 = arith.constant 0 : index
    %c0_16 = arith.constant 0 : index
    %20 = vector.load %arg7[%c0_15, %c0_16] : memref<128x1xf32, #tpu.memory_space<vmem>>, vector<128x1xf32>
    %21 = vector.broadcast %20 : vector<128x1xf32> to vector<128x128xf32>
    %22 = arith.addf %19, %21 : vector<128x128xf32>
    %cst_17 = arith.constant 0.000000e+00 : f32
    %23 = vector.broadcast %cst_17 : f32 to vector<128x128xf32>
    %24 = arith.maximumf %22, %23 : vector<128x128xf32>
    %25 = arith.truncf %24 : vector<128x128xf32> to vector<128x128xbf16>
    %c0_18 = arith.constant 0 : index
    %c0_19 = arith.constant 0 : index
    %26 = vector.load %arg8[%c0_18, %c0_19] : memref<64x128xbf16, #tpu.memory_space<vmem>>, vector<64x128xbf16>
    %cst_20 = arith.constant dense<0.000000e+00> : vector<64x128xf32>
    %27 = tpu.matmul %26, %25, %cst_20 {dimension_numbers = #tpu.dot_dimension_numbers<[1], [0], [0], [1], [0, 0, 1, 1], [], []>} : vector<64x128xbf16>, vector<128x128xbf16>, vector<64x128xf32> -> vector<64x128xf32>
    %c0_21 = arith.constant 0 : index
    %c0_22 = arith.constant 0 : index
    %28 = vector.load %arg9[%c0_21, %c0_22] : memref<64x1xf32, #tpu.memory_space<vmem>>, vector<64x1xf32>
    %29 = vector.broadcast %28 : vector<64x1xf32> to vector<64x128xf32>
    %30 = arith.addf %27, %29 : vector<64x128xf32>
    %cst_23 = arith.constant 0.000000e+00 : f32
    %31 = vector.broadcast %cst_23 : f32 to vector<64x128xf32>
    %32 = arith.maximumf %30, %31 : vector<64x128xf32>
    %33 = arith.truncf %32 : vector<64x128xf32> to vector<64x128xbf16>
    %c0_24 = arith.constant 0 : index
    %c0_25 = arith.constant 0 : index
    %34 = vector.load %arg10[%c0_24, %c0_25] : memref<32x64xbf16, #tpu.memory_space<vmem>>, vector<32x64xbf16>
    %cst_26 = arith.constant dense<0.000000e+00> : vector<32x128xf32>
    %35 = tpu.matmul %34, %33, %cst_26 {dimension_numbers = #tpu.dot_dimension_numbers<[1], [0], [0], [1], [0, 0, 1, 1], [], []>} : vector<32x64xbf16>, vector<64x128xbf16>, vector<32x128xf32> -> vector<32x128xf32>
    %c0_27 = arith.constant 0 : index
    %c0_28 = arith.constant 0 : index
    %36 = vector.load %arg11[%c0_27, %c0_28] : memref<32x1xf32, #tpu.memory_space<vmem>>, vector<32x1xf32>
    %37 = vector.broadcast %36 : vector<32x1xf32> to vector<32x128xf32>
    %38 = arith.addf %35, %37 : vector<32x128xf32>
    %cst_29 = arith.constant 0.000000e+00 : f32
    %39 = vector.broadcast %cst_29 : f32 to vector<32x128xf32>
    %40 = arith.maximumf %38, %39 : vector<32x128xf32>
    %41 = arith.truncf %40 : vector<32x128xf32> to vector<32x128xbf16>
    %c0_30 = arith.constant 0 : index
    %c0_31 = arith.constant 0 : index
    %42 = vector.load %arg12[%c0_30, %c0_31] : memref<3x32xbf16, #tpu.memory_space<vmem>>, vector<3x32xbf16>
    %cst_32 = arith.constant dense<0.000000e+00> : vector<3x128xf32>
    %43 = tpu.matmul %42, %41, %cst_32 {dimension_numbers = #tpu.dot_dimension_numbers<[1], [0], [0], [1], [0, 0, 1, 1], [], []>} : vector<3x32xbf16>, vector<32x128xbf16>, vector<3x128xf32> -> vector<3x128xf32>
    %c0_33 = arith.constant 0 : index
    %c0_34 = arith.constant 0 : index
    %44 = vector.load %arg13[%c0_33, %c0_34] : memref<3x1xf32, #tpu.memory_space<vmem>>, vector<3x1xf32>
    %45 = vector.broadcast %44 : vector<3x1xf32> to vector<3x128xf32>
    %46 = arith.addf %43, %45 : vector<3x128xf32>
    %c0_35 = arith.constant 0 : index
    %c0_36 = arith.constant 0 : index
    %47 = vector.load %arg14[%c0_35, %c0_36] : memref<3x128xf32, #tpu.memory_space<vmem>>, vector<3x128xf32>
    tpu.vector_store %arg14[%c0_35, %c0_36], %46 {strides = array<i32>} : memref<3x128xf32, #tpu.memory_space<vmem>>, vector<3x128xf32>,
    return
  }
  func.func @transform_0(%arg0: i32) -> (i32, i32) {
    %c0_i32 = arith.constant 0 : i32
    %c0_i32_0 = arith.constant 0 : i32
    return %c0_i32, %arg0 : i32, i32
  }
  func.func @transform_1(%arg0: i32) -> (i32, i32) {
    %c0_i32 = arith.constant 0 : i32
    %c0_i32_0 = arith.constant 0 : i32
    %c0_i32_1 = arith.constant 0 : i32
    return %c0_i32, %c0_i32_0 : i32, i32
  }
  func.func @transform_2(%arg0: i32) -> (i32, i32) {
    %c0_i32 = arith.constant 0 : i32
    %c0_i32_0 = arith.constant 0 : i32
    %c0_i32_1 = arith.constant 0 : i32
    return %c0_i32, %c0_i32_0 : i32, i32
  }
  func.func @transform_3(%arg0: i32) -> (i32, i32) {
    %c0_i32 = arith.constant 0 : i32
    %c0_i32_0 = arith.constant 0 : i32
    %c0_i32_1 = arith.constant 0 : i32
    return %c0_i32, %c0_i32_0 : i32, i32
  }
  func.func @transform_4(%arg0: i32) -> (i32, i32) {
    %c0_i32 = arith.constant 0 : i32
    %c0_i32_0 = arith.constant 0 : i32
    %c0_i32_1 = arith.constant 0 : i32
    return %c0_i32, %c0_i32_0 : i32, i32
  }
  func.func @transform_5(%arg0: i32) -> (i32, i32) {
    %c0_i32 = arith.constant 0 : i32
    %c0_i32_0 = arith.constant 0 : i32
    %c0_i32_1 = arith.constant 0 : i32
    return %c0_i32, %c0_i32_0 : i32, i32
  }
  func.func @transform_6(%arg0: i32) -> (i32, i32) {
    %c0_i32 = arith.constant 0 : i32
    %c0_i32_0 = arith.constant 0 : i32
    %c0_i32_1 = arith.constant 0 : i32
    return %c0_i32, %c0_i32_0 : i32, i32
  }
  func.func @transform_7(%arg0: i32) -> (i32, i32) {
    %c0_i32 = arith.constant 0 : i32
    %c0_i32_0 = arith.constant 0 : i32
    %c0_i32_1 = arith.constant 0 : i32
    return %c0_i32, %c0_i32_0 : i32, i32
  }
  func.func @transform_8(%arg0: i32) -> (i32, i32) {
    %c0_i32 = arith.constant 0 : i32
    %c0_i32_0 = arith.constant 0 : i32
    %c0_i32_1 = arith.constant 0 : i32
    return %c0_i32, %c0_i32_0 : i32, i32
  }
  func.func @transform_9(%arg0: i32) -> (i32, i32) {
    %c0_i32 = arith.constant 0 : i32
    %c0_i32_0 = arith.constant 0 : i32
    %c0_i32_1 = arith.constant 0 : i32
    return %c0_i32, %c0_i32_0 : i32, i32
  }
  func.func @transform_10(%arg0: i32) -> (i32, i32) {
    %c0_i32 = arith.constant 0 : i32
    %c0_i32_0 = arith.constant 0 : i32
    %c0_i32_1 = arith.constant 0 : i32
    return %c0_i32, %c0_i32_0 : i32, i32
  }
  func.func @transform_11(%arg0: i32) -> (i32, i32) {
    %c0_i32 = arith.constant 0 : i32
    %c0_i32_0 = arith.constant 0 : i32
    %c0_i32_1 = arith.constant 0 : i32
    return %c0_i32, %c0_i32_0 : i32, i32
  }
  func.func @transform_12(%arg0: i32) -> (i32, i32) {
    %c0_i32 = arith.constant 0 : i32
    %c0_i32_0 = arith.constant 0 : i32
    %c0_i32_1 = arith.constant 0 : i32
    return %c0_i32, %c0_i32_0 : i32, i32
  }
  func.func @transform_13(%arg0: i32) -> (i32, i32) {
    %c0_i32 = arith.constant 0 : i32
    %c0_i32_0 = arith.constant 0 : i32
    return %c0_i32, %arg0 : i32, i32
  }
}

</mosaic_0001>

<llo_original>
// kernel: tpu_custom_call.1
$region0: #{tpu_custom_call.1}
  #allocation0 [shape = 'u32[]', space=smem, size = 0x4, offset = 0x4, fixed_abs, tag = 'smem constant byte address 0x4 - core index']
  #allocation1 [shape = 'u32[144,128]{1,0:T(1,128)}', space=vmem, size = 0x12000, scoped, tag = 'internal scratch']
  %s0 = inlined_call_operand.vmem [shape: f32[6,128], index: 0, kind: input, shape index: {}]
  %s1 = inlined_call_operand.vmem [shape: bf16[32,6], index: 1, kind: input, shape index: {}]
  %s2 = inlined_call_operand.vmem [shape: f32[32,1], index: 2, kind: input, shape index: {}]
  %s3 = inlined_call_operand.vmem [shape: bf16[64,32], index: 3, kind: input, shape index: {}]
  %s4 = inlined_call_operand.vmem [shape: f32[64,1], index: 4, kind: input, shape index: {}]
  %s5 = inlined_call_operand.vmem [shape: bf16[128,64], index: 5, kind: input, shape index: {}]
  %s6 = inlined_call_operand.vmem [shape: f32[128,1], index: 6, kind: input, shape index: {}]
  %s7 = inlined_call_operand.vmem [shape: bf16[64,128], index: 7, kind: input, shape index: {}]
  %s8 = inlined_call_operand.vmem [shape: f32[64,1], index: 8, kind: input, shape index: {}]
  %s9 = inlined_call_operand.vmem [shape: bf16[32,64], index: 9, kind: input, shape index: {}]
  %s10 = inlined_call_operand.vmem [shape: f32[32,1], index: 10, kind: input, shape index: {}]
  %s11 = inlined_call_operand.vmem [shape: bf16[3,32], index: 11, kind: input, shape index: {}]
  %s12 = inlined_call_operand.vmem [shape: f32[3,1], index: 12, kind: input, shape index: {}]
  %s13 = inlined_call_operand.hbm [shape: f32[3,128], index: 13, kind: output, shape index: {}]
  %s14 = sld [smem:[#allocation0]]
  $region62: #{tpu_custom_call.1} parent=0
    _
  %s16 = ssub.s32 1, %s14
  %s17 = scalar_select 0, %s16, %s14
  $region1: #{tpu_custom_call.1} parent=0
    #allocation2 [shape = 'u8[2048]{0}', space=vmem, size = 0x800, scoped, tag = 'output window, operand 0, single buffered']
    #allocation3 [shape = 's32[1]{0}', space=sflag, size = 0x4, scoped, tag = 'scoped memory for tpu_custom_call.1']
    %18 = vsyncpa [#allocation3], 0
    // Predicated region
    $region2: #{tpu_custom_call.1} parent=1 // pred_check
      _
    $region3: #{tpu_custom_call.1} parent=1 // pred_check_branch
      %20 = sbr.rel (0) target = $region5
    $region4: #{tpu_custom_call.1} parent=1 // pred_region
      _
    $region5: #{tpu_custom_call.1} parent=1 // pred_fallthru
      _
    // Predicated region
    $region6: #{tpu_custom_call.1} parent=1 // pred_check
      _
    $region7: #{tpu_custom_call.1} parent=1 // pred_check_branch
      %22 = sbr.rel (0) target = $region9
    $region8: #{tpu_custom_call.1} parent=1 // pred_region
      _
    $region9: #{tpu_custom_call.1} parent=1 // pred_fallthru
      _
    // Predicated region
    $region10: #{tpu_custom_call.1} parent=1 // pred_check
      _
    $region11: #{tpu_custom_call.1} parent=1 // pred_check_branch
      %24 = sbr.rel (0) target = $region13
    $region12: #{tpu_custom_call.1} parent=1 // pred_region
      _
    $region13: #{tpu_custom_call.1} parent=1 // pred_fallthru
      _
    // Predicated region
    $region14: #{tpu_custom_call.1} parent=1 // pred_check
      _
    $region15: #{tpu_custom_call.1} parent=1 // pred_check_branch
      %26 = sbr.rel (0) target = $region17
    $region16: #{tpu_custom_call.1} parent=1 // pred_region
      _
    $region17: #{tpu_custom_call.1} parent=1 // pred_fallthru
      _
    // Predicated region
    $region18: #{tpu_custom_call.1} parent=1 // pred_check
      _
    $region19: #{tpu_custom_call.1} parent=1 // pred_check_branch
      %28 = sbr.rel (0) target = $region21
    $region20: #{tpu_custom_call.1} parent=1 // pred_region
      _
    $region21: #{tpu_custom_call.1} parent=1 // pred_fallthru
      _
    // Predicated region
    $region22: #{tpu_custom_call.1} parent=1 // pred_check
      _
    $region23: #{tpu_custom_call.1} parent=1 // pred_check_branch
      %30 = sbr.rel (0) target = $region25
    $region24: #{tpu_custom_call.1} parent=1 // pred_region
      _
    $region25: #{tpu_custom_call.1} parent=1 // pred_fallthru
      _
    // Predicated region
    $region26: #{tpu_custom_call.1} parent=1 // pred_check
      _
    $region27: #{tpu_custom_call.1} parent=1 // pred_check_branch
      %32 = sbr.rel (0) target = $region29
    $region28: #{tpu_custom_call.1} parent=1 // pred_region
      _
    $region29: #{tpu_custom_call.1} parent=1 // pred_fallthru
      _
    // Predicated region
    $region30: #{tpu_custom_call.1} parent=1 // pred_check
      _
    $region31: #{tpu_custom_call.1} parent=1 // pred_check_branch
      %34 = sbr.rel (0) target = $region33
    $region32: #{tpu_custom_call.1} parent=1 // pred_region
      _
    $region33: #{tpu_custom_call.1} parent=1 // pred_fallthru
      _
    // Predicated region
    $region34: #{tpu_custom_call.1} parent=1 // pred_check
      _
    $region35: #{tpu_custom_call.1} parent=1 // pred_check_branch
      %36 = sbr.rel (0) target = $region37
    $region36: #{tpu_custom_call.1} parent=1 // pred_region
      _
    $region37: #{tpu_custom_call.1} parent=1 // pred_fallthru
      _
    // Predicated region
    $region38: #{tpu_custom_call.1} parent=1 // pred_check
      _
    $region39: #{tpu_custom_call.1} parent=1 // pred_check_branch
      %38 = sbr.rel (0) target = $region41
    $region40: #{tpu_custom_call.1} parent=1 // pred_region
      _
    $region41: #{tpu_custom_call.1} parent=1 // pred_fallthru
      _
    // Predicated region
    $region42: #{tpu_custom_call.1} parent=1 // pred_check
      _
    $region43: #{tpu_custom_call.1} parent=1 // pred_check_branch
      %40 = sbr.rel (0) target = $region45
    $region44: #{tpu_custom_call.1} parent=1 // pred_region
      _
    $region45: #{tpu_custom_call.1} parent=1 // pred_fallthru
      _
    // Predicated region
    $region46: #{tpu_custom_call.1} parent=1 // pred_check
      _
    $region47: #{tpu_custom_call.1} parent=1 // pred_check_branch
      %42 = sbr.rel (0) target = $region49
    $region48: #{tpu_custom_call.1} parent=1 // pred_region
      _
    $region49: #{tpu_custom_call.1} parent=1 // pred_fallthru
      _
    // Predicated region
    $region50: #{tpu_custom_call.1} parent=1 // pred_check
      _
    $region51: #{tpu_custom_call.1} parent=1 // pred_check_branch
      %44 = sbr.rel (0) target = $region53
    $region52: #{tpu_custom_call.1} parent=1 // pred_region
      _
    $region53: #{tpu_custom_call.1} parent=1 // pred_fallthru
      _
    %v46 = vld [vmem:[%s0] sm:$0x3f]
    %v47 = vpack.c.bf16 %v46, %v46
    %v48 = vld [vmem:[%s1] sm:$0xf]
    %v49 = vld [vmem:[%s1 + $0x4] sm:$0xf]
    %v50 = vld [vmem:[%s1 + $0x8] sm:$0xf]
    %v51 = vld [vmem:[%s1 + $0xc] sm:$0xf]
    %v52 = vld [vmem:[%s2] sm:$0xff]
    %v53 = vld [vmem:[%s2 + $0x8] sm:$0xff]
    %v54 = vld [vmem:[%s2 + $0x10] sm:$0xff]
    %v55 = vld [vmem:[%s2 + $0x18] sm:$0xff]
    %57 = vset.pattern.permute.xlu0 0
    %58 = vperm.xlu0 %57, %v52
    %v59 = vpop.permute.xlu0 %58
    %62 = vset.pattern.permute.xlu0 0
    %63 = vperm.xlu0 %62, %v53
    %v64 = vpop.permute.xlu0 %63
    %67 = vset.pattern.permute.xlu0 0
    %68 = vperm.xlu0 %67, %v54
    %v69 = vpop.permute.xlu0 %68
    %72 = vset.pattern.permute.xlu0 0
    %73 = vperm.xlu0 %72, %v55
    %v74 = vpop.permute.xlu0 %73
    %v80 = vunpack.c.l.b16 %v48
    %v81 = vunpack.c.l.b16 %v49
    %v82 = vunpack.c.l.b16 %v50
    %v83 = vunpack.c.l.b16 %v51
    %v84 = vpack.c.b16 %v81, %v80
    %v85 = vpack.c.b16 %v83, %v82
    %vm86 = vcmask 48128
    %v88 = vsel %vm86, %v84, 0
    %v91 = vsel %vm86, %v85, 0
    %vm93 = vcmask 1042432
    %v95 = vsel %vm93, %v47, 0
    %97 = vmatprep.subr.bf16.mxu0 0
    %98 = vmatpush1.bf16.msra.mxu0 %v95
    %99 = vmatprep.subr.bf16.mxu0 0
    %100 = vmatpush1.bf16.msra.mxu0 0
    %101 = vmatprep.subr.bf16.mxu0 0
    %102 = vmatpush1.bf16.msra.mxu0 0
    %103 = vmatprep.subr.bf16.mxu0 0
    %104 = vmatpush1.bf16.msra.mxu0 0
    %105 = vmatprep.subr.bf16.mxu0 0
    %106 = vmatpush1.bf16.msra.mxu0 0
    %107 = vmatprep.subr.bf16.mxu0 0
    %108 = vmatpush1.bf16.msra.mxu0 0
    %109 = vmatprep.subr.bf16.mxu0 0
    %110 = vmatpush1.bf16.msra.mxu0 0
    %111 = vmatprep.subr.bf16.mxu0 0
    %112 = vmatpush1.bf16.msra.mxu0 0
    %113 = vmatprep.subr.bf16.mxu0 0
    %114 = vmatpush1.bf16.msra.mxu0 0
    %115 = vmatprep.subr.bf16.mxu0 0
    %116 = vmatpush1.bf16.msra.mxu0 0
    %117 = vmatprep.subr.bf16.mxu0 0
    %118 = vmatpush1.bf16.msra.mxu0 0
    %119 = vmatprep.subr.bf16.mxu0 0
    %120 = vmatpush1.bf16.msra.mxu0 0
    %121 = vmatprep.subr.bf16.mxu0 0
    %122 = vmatpush1.bf16.msra.mxu0 0
    %123 = vmatprep.subr.bf16.mxu0 0
    %124 = vmatpush1.bf16.msra.mxu0 0
    %125 = vmatprep.subr.bf16.mxu0 0
    %126 = vmatpush1.bf16.msra.mxu0 0
    %127 = vmatprep.subr.bf16.mxu0 0
    %128 = vmatpush1.bf16.msra.mxu0 0
    %129 = vmatprep.mubr.bf16.mxu0 0
    %130 = vmatmul.mubr.bf16.gmra.mrb[0].mxu0 %v88
    %v131 = vpop.f32.mrb[0].mxu0
    %v132 = vadd.f32 %v59, %v131
    %v133 = vpop.f32.mrb[0].mxu0
    %v134 = vpop.f32.mrb[0].mxu0
    %v135 = vadd.f32 %v64, %v134
    %v136 = vpop.f32.mrb[0].mxu0
    %137 = vmatprep.mubr.bf16.mxu0 0
    %138 = vmatmul.mubr.bf16.gmra.mrb[0].mxu0 %v91
    %v139 = vpop.f32.mrb[0].mxu0
    %v140 = vadd.f32 %v69, %v139
    %v141 = vpop.f32.mrb[0].mxu0
    %v142 = vpop.f32.mrb[0].mxu0
    %v143 = vadd.f32 %v74, %v142
    %v144 = vpop.f32.mrb[0].mxu0
    %145 = vdwg.mxu0
    %v146 = vmax.f32 %v132, 0.0
    %v147 = vmax.f32 %v135, 0.0
    %v148 = vmax.f32 %v140, 0.0
    %v149 = vmax.f32 %v143, 0.0
    %v150 = vpack.c.bf16 %v147, %v146
    %v151 = vpack.c.bf16 %v149, %v148
    %v152 = vld [vmem:[%s3] sm:$0xf]
    %v153 = vld [vmem:[%s3 + $0x4] sm:$0xf]
    %v154 = vld [vmem:[%s3 + $0x8] sm:$0xf]
    %v155 = vld [vmem:[%s3 + $0xc] sm:$0xf]
    %v156 = vld [vmem:[%s3 + $0x10] sm:$0xf]
    %v157 = vld [vmem:[%s3 + $0x14] sm:$0xf]
    %v158 = vld [vmem:[%s3 + $0x18] sm:$0xf]
    %v159 = vld [vmem:[%s3 + $0x1c] sm:$0xf]
    %v160 = vld [vmem:[%s4] sm:$0xff]
    %v161 = vld [vmem:[%s4 + $0x8] sm:$0xff]
    %v162 = vld [vmem:[%s4 + $0x10] sm:$0xff]
    %v163 = vld [vmem:[%s4 + $0x18] sm:$0xff]
    %v164 = vld [vmem:[%s4 + $0x20] sm:$0xff]
    %v165 = vld [vmem:[%s4 + $0x28] sm:$0xff]
    %v166 = vld [vmem:[%s4 + $0x30] sm:$0xff]
    %v167 = vld [vmem:[%s4 + $0x38] sm:$0xff]
    %169 = vset.pattern.permute.xlu0 0
    %170 = vperm.xlu0 %169, %v160
    %v171 = vpop.permute.xlu0 %170
    %174 = vset.pattern.permute.xlu0 0
    %175 = vperm.xlu0 %174, %v161
    %v176 = vpop.permute.xlu0 %175
    %179 = vset.pattern.permute.xlu0 0
    %180 = vperm.xlu0 %179, %v162
    %v181 = vpop.permute.xlu0 %180
    %184 = vset.pattern.permute.xlu0 0
    %185 = vperm.xlu0 %184, %v163
    %v186 = vpop.permute.xlu0 %185
    %189 = vset.pattern.permute.xlu0 0
    %190 = vperm.xlu0 %189, %v164
    %v191 = vpop.permute.xlu0 %190
    %194 = vset.pattern.permute.xlu0 0
    %195 = vperm.xlu0 %194, %v165
    %v196 = vpop.permute.xlu0 %195
    %199 = vset.pattern.permute.xlu0 0
    %200 = vperm.xlu0 %199, %v166
    %v201 = vpop.permute.xlu0 %200
    %204 = vset.pattern.permute.xlu0 0
    %205 = vperm.xlu0 %204, %v167
    %v206 = vpop.permute.xlu0 %205
    %v216 = vunpack.c.l.b16 %v152
    %v217 = vunpack.c.l.b16 %v153
    %v218 = vunpack.c.l.b16 %v154
    %v219 = vunpack.c.l.b16 %v155
    %v220 = vunpack.c.l.b16 %v156
    %v221 = vunpack.c.l.b16 %v157
    %v222 = vunpack.c.l.b16 %v158
    %v223 = vunpack.c.l.b16 %v159
    %v224 = vpack.c.b16 %v217, %v216
    %v225 = vpack.c.b16 %v219, %v218
    %v226 = vpack.c.b16 %v221, %v220
    %v227 = vpack.c.b16 %v223, %v222
    %vm228 = vcmask 261120
    %v230 = vsel %vm228, %v224, 0
    %v233 = vsel %vm228, %v225, 0
    %v236 = vsel %vm228, %v226, 0
    %v239 = vsel %vm228, %v227, 0
    %241 = vmatprep.subr.bf16.mxu0 0
    %242 = vmatpush1.bf16.msra.mxu0 %v150
    %243 = vmatprep.subr.bf16.mxu0 0
    %244 = vmatpush1.bf16.msra.mxu0 %v151
    %245 = vmatprep.subr.bf16.mxu0 0
    %246 = vmatpush1.bf16.msra.mxu0 0
    %247 = vmatprep.subr.bf16.mxu0 0
    %248 = vmatpush1.bf16.msra.mxu0 0
    %249 = vmatprep.subr.bf16.mxu0 0
    %250 = vmatpush1.bf16.msra.mxu0 0
    %251 = vmatprep.subr.bf16.mxu0 0
    %252 = vmatpush1.bf16.msra.mxu0 0
    %253 = vmatprep.subr.bf16.mxu0 0
    %254 = vmatpush1.bf16.msra.mxu0 0
    %255 = vmatprep.subr.bf16.mxu0 0
    %256 = vmatpush1.bf16.msra.mxu0 0
    %257 = vmatprep.subr.bf16.mxu0 0
    %258 = vmatpush1.bf16.msra.mxu0 0
    %259 = vmatprep.subr.bf16.mxu0 0
    %260 = vmatpush1.bf16.msra.mxu0 0
    %261 = vmatprep.subr.bf16.mxu0 0
    %262 = vmatpush1.bf16.msra.mxu0 0
    %263 = vmatprep.subr.bf16.mxu0 0
    %264 = vmatpush1.bf16.msra.mxu0 0
    %265 = vmatprep.subr.bf16.mxu0 0
    %266 = vmatpush1.bf16.msra.mxu0 0
    %267 = vmatprep.subr.bf16.mxu0 0
    %268 = vmatpush1.bf16.msra.mxu0 0
    %269 = vmatprep.subr.bf16.mxu0 0
    %270 = vmatpush1.bf16.msra.mxu0 0
    %271 = vmatprep.subr.bf16.mxu0 0
    %272 = vmatpush1.bf16.msra.mxu0 0
    %273 = vmatprep.mubr.bf16.mxu0 0
    %274 = vmatmul.mubr.bf16.gmra.mrb[0].mxu0 %v230
    %v275 = vpop.f32.mrb[0].mxu0
    %v276 = vadd.f32 %v171, %v275
    %v277 = vpop.f32.mrb[0].mxu0
    %v278 = vpop.f32.mrb[0].mxu0
    %v279 = vadd.f32 %v176, %v278
    %v280 = vpop.f32.mrb[0].mxu0
    %281 = vmatprep.mubr.bf16.mxu0 0
    %282 = vmatmul.mubr.bf16.gmra.mrb[0].mxu0 %v233
    %v283 = vpop.f32.mrb[0].mxu0
    %v284 = vadd.f32 %v181, %v283
    %v285 = vpop.f32.mrb[0].mxu0
    %v286 = vpop.f32.mrb[0].mxu0
    %v287 = vadd.f32 %v186, %v286
    %v288 = vpop.f32.mrb[0].mxu0
    %289 = vmatprep.mubr.bf16.mxu0 0
    %290 = vmatmul.mubr.bf16.gmra.mrb[0].mxu0 %v236
    %v291 = vpop.f32.mrb[0].mxu0
    %v292 = vadd.f32 %v191, %v291
    %v293 = vpop.f32.mrb[0].mxu0
    %v294 = vpop.f32.mrb[0].mxu0
    %v295 = vadd.f32 %v196, %v294
    %v296 = vpop.f32.mrb[0].mxu0
    %297 = vmatprep.mubr.bf16.mxu0 0
    %298 = vmatmul.mubr.bf16.gmra.mrb[0].mxu0 %v239
    %v299 = vpop.f32.mrb[0].mxu0
    %v300 = vadd.f32 %v201, %v299
    %v301 = vpop.f32.mrb[0].mxu0
    %v302 = vpop.f32.mrb[0].mxu0
    %v303 = vadd.f32 %v206, %v302
    %v304 = vpop.f32.mrb[0].mxu0
    %305 = vdwg.mxu0
    %v306 = vmax.f32 %v276, 0.0
    %v307 = vmax.f32 %v279, 0.0
    %v308 = vmax.f32 %v284, 0.0
    %v309 = vmax.f32 %v287, 0.0
    %v310 = vmax.f32 %v292, 0.0
    %v311 = vmax.f32 %v295, 0.0
    %v312 = vmax.f32 %v300, 0.0
    %v313 = vmax.f32 %v303, 0.0
    %v314 = vpack.c.bf16 %v307, %v306
    %v315 = vpack.c.bf16 %v309, %v308
    %v316 = vpack.c.bf16 %v311, %v310
    %v317 = vpack.c.bf16 %v313, %v312
    %v318 = vld [vmem:[%s5] sm:$0xf]
    %v319 = vld [vmem:[%s5 + $0x4] sm:$0xf]
    %v320 = vld [vmem:[%s5 + $0x8] sm:$0xf]
    %v321 = vld [vmem:[%s5 + $0xc] sm:$0xf]
    %v322 = vld [vmem:[%s5 + $0x10] sm:$0xf]
    %v323 = vld [vmem:[%s5 + $0x14] sm:$0xf]
    %v324 = vld [vmem:[%s5 + $0x18] sm:$0xf]
    %v325 = vld [vmem:[%s5 + $0x1c] sm:$0xf]
    %v326 = vld [vmem:[%s5 + $0x20] sm:$0xf]
    %v327 = vld [vmem:[%s5 + $0x24] sm:$0xf]
    %v328 = vld [vmem:[%s5 + $0x28] sm:$0xf]
    %v329 = vld [vmem:[%s5 + $0x2c] sm:$0xf]
    %v330 = vld [vmem:[%s5 + $0x30] sm:$0xf]
    %v331 = vld [vmem:[%s5 + $0x34] sm:$0xf]
    %v332 = vld [vmem:[%s5 + $0x38] sm:$0xf]
    %v333 = vld [vmem:[%s5 + $0x3c] sm:$0xf]
    %v334 = vld [vmem:[%s6] sm:$0xff]
    %v335 = vld [vmem:[%s6 + $0x8] sm:$0xff]
    %v336 = vld [vmem:[%s6 + $0x10] sm:$0xff]
    %v337 = vld [vmem:[%s6 + $0x18] sm:$0xff]
    %v338 = vld [vmem:[%s6 + $0x20] sm:$0xff]
    %v339 = vld [vmem:[%s6 + $0x28] sm:$0xff]
    %v340 = vld [vmem:[%s6 + $0x30] sm:$0xff]
    %v341 = vld [vmem:[%s6 + $0x38] sm:$0xff]
    %v342 = vld [vmem:[%s6 + $0x40] sm:$0xff]
    %v343 = vld [vmem:[%s6 + $0x48] sm:$0xff]
    %v344 = vld [vmem:[%s6 + $0x50] sm:$0xff]
    %v345 = vld [vmem:[%s6 + $0x58] sm:$0xff]
    %v346 = vld [vmem:[%s6 + $0x60] sm:$0xff]
    %v347 = vld [vmem:[%s6 + $0x68] sm:$0xff]
    %v348 = vld [vmem:[%s6 + $0x70] sm:$0xff]
    %v349 = vld [vmem:[%s6 + $0x78] sm:$0xff]
    %351 = vset.pattern.permute.xlu0 0
    %352 = vperm.xlu0 %351, %v334
    %v353 = vpop.permute.xlu0 %352
    %356 = vset.pattern.permute.xlu0 0
    %357 = vperm.xlu0 %356, %v335
    %v358 = vpop.permute.xlu0 %357
    %361 = vset.pattern.permute.xlu0 0
    %362 = vperm.xlu0 %361, %v336
    %v363 = vpop.permute.xlu0 %362
    %366 = vset.pattern.permute.xlu0 0
    %367 = vperm.xlu0 %366, %v337
    %v368 = vpop.permute.xlu0 %367
    %371 = vset.pattern.permute.xlu0 0
    %372 = vperm.xlu0 %371, %v338
    %v373 = vpop.permute.xlu0 %372
    %376 = vset.pattern.permute.xlu0 0
    %377 = vperm.xlu0 %376, %v339
    %v378 = vpop.permute.xlu0 %377
    %381 = vset.pattern.permute.xlu0 0
    %382 = vperm.xlu0 %381, %v340
    %v383 = vpop.permute.xlu0 %382
    %386 = vset.pattern.permute.xlu0 0
    %387 = vperm.xlu0 %386, %v341
    %v388 = vpop.permute.xlu0 %387
    %391 = vset.pattern.permute.xlu0 0
    %392 = vperm.xlu0 %391, %v342
    %v393 = vpop.permute.xlu0 %392
    %396 = vset.pattern.permute.xlu0 0
    %397 = vperm.xlu0 %396, %v343
    %v398 = vpop.permute.xlu0 %397
    %401 = vset.pattern.permute.xlu0 0
    %402 = vperm.xlu0 %401, %v344
    %v403 = vpop.permute.xlu0 %402
    %406 = vset.pattern.permute.xlu0 0
    %407 = vperm.xlu0 %406, %v345
    %v408 = vpop.permute.xlu0 %407
    %411 = vset.pattern.permute.xlu0 0
    %412 = vperm.xlu0 %411, %v346
    %v413 = vpop.permute.xlu0 %412
    %416 = vset.pattern.permute.xlu0 0
    %417 = vperm.xlu0 %416, %v347
    %v418 = vpop.permute.xlu0 %417
    %421 = vset.pattern.permute.xlu0 0
    %422 = vperm.xlu0 %421, %v348
    %v423 = vpop.permute.xlu0 %422
    %426 = vset.pattern.permute.xlu0 0
    %427 = vperm.xlu0 %426, %v349
    %v428 = vpop.permute.xlu0 %427
    %v446 = vunpack.c.l.b16 %v318
    %v447 = vunpack.c.l.b16 %v319
    %v448 = vunpack.c.l.b16 %v320
    %v449 = vunpack.c.l.b16 %v321
    %v450 = vunpack.c.l.b16 %v322
    %v451 = vunpack.c.l.b16 %v323
    %v452 = vunpack.c.l.b16 %v324
    %v453 = vunpack.c.l.b16 %v325
    %v454 = vunpack.c.l.b16 %v326
    %v455 = vunpack.c.l.b16 %v327
    %v456 = vunpack.c.l.b16 %v328
    %v457 = vunpack.c.l.b16 %v329
    %v458 = vunpack.c.l.b16 %v330
    %v459 = vunpack.c.l.b16 %v331
    %v460 = vunpack.c.l.b16 %v332
    %v461 = vunpack.c.l.b16 %v333
    %v462 = vpack.c.b16 %v447, %v446
    %v463 = vpack.c.b16 %v449, %v448
    %v464 = vpack.c.b16 %v451, %v450
    %v465 = vpack.c.b16 %v453, %v452
    %v466 = vpack.c.b16 %v455, %v454
    %v467 = vpack.c.b16 %v457, %v456
    %v468 = vpack.c.b16 %v459, %v458
    %v469 = vpack.c.b16 %v461, %v460
    %vm470 = vcmask 523264
    %v472 = vsel %vm470, %v462, 0
    %v475 = vsel %vm470, %v463, 0
    %v478 = vsel %vm470, %v464, 0
    %v481 = vsel %vm470, %v465, 0
    %v484 = vsel %vm470, %v466, 0
    %v487 = vsel %vm470, %v467, 0
    %v490 = vsel %vm470, %v468, 0
    %v493 = vsel %vm470, %v469, 0
    %495 = vmatprep.subr.bf16.mxu0 0
    %496 = vmatpush1.bf16.msra.mxu0 %v314
    %497 = vmatprep.subr.bf16.mxu0 0
    %498 = vmatpush1.bf16.msra.mxu0 %v315
    %499 = vmatprep.subr.bf16.mxu0 0
    %500 = vmatpush1.bf16.msra.mxu0 %v316
    %501 = vmatprep.subr.bf16.mxu0 0
    %502 = vmatpush1.bf16.msra.mxu0 %v317
    %503 = vmatprep.subr.bf16.mxu0 0
    %504 = vmatpush1.bf16.msra.mxu0 0
    %505 = vmatprep.subr.bf16.mxu0 0
    %506 = vmatpush1.bf16.msra.mxu0 0
    %507 = vmatprep.subr.bf16.mxu0 0
    %508 = vmatpush1.bf16.msra.mxu0 0
    %509 = vmatprep.subr.bf16.mxu0 0
    %510 = vmatpush1.bf16.msra.mxu0 0
    %511 = vmatprep.subr.bf16.mxu0 0
    %512 = vmatpush1.bf16.msra.mxu0 0
    %513 = vmatprep.subr.bf16.mxu0 0
    %514 = vmatpush1.bf16.msra.mxu0 0
    %515 = vmatprep.subr.bf16.mxu0 0
    %516 = vmatpush1.bf16.msra.mxu0 0
    %517 = vmatprep.subr.bf16.mxu0 0
    %518 = vmatpush1.bf16.msra.mxu0 0
    %519 = vmatprep.subr.bf16.mxu0 0
    %520 = vmatpush1.bf16.msra.mxu0 0
    %521 = vmatprep.subr.bf16.mxu0 0
    %522 = vmatpush1.bf16.msra.mxu0 0
    %523 = vmatprep.subr.bf16.mxu0 0
    %524 = vmatpush1.bf16.msra.mxu0 0
    %525 = vmatprep.subr.bf16.mxu0 0
    %526 = vmatpush1.bf16.msra.mxu0 0
    %527 = vmatprep.mubr.bf16.mxu0 0
    %528 = vmatmul.mubr.bf16.gmra.mrb[0].mxu0 %v472
    %v529 = vpop.f32.mrb[0].mxu0
    %v530 = vadd.f32 %v353, %v529
    %v531 = vpop.f32.mrb[0].mxu0
    %v532 = vpop.f32.mrb[0].mxu0
    %v533 = vadd.f32 %v358, %v532
    %v534 = vpop.f32.mrb[0].mxu0
    %535 = vmatprep.mubr.bf16.mxu0 0
    %536 = vmatmul.mubr.bf16.gmra.mrb[0].mxu0 %v475
    %v537 = vpop.f32.mrb[0].mxu0
    %v538 = vadd.f32 %v363, %v537
    %v539 = vpop.f32.mrb[0].mxu0
    %v540 = vpop.f32.mrb[0].mxu0
    %v541 = vadd.f32 %v368, %v540
    %v542 = vpop.f32.mrb[0].mxu0
    %543 = vmatprep.mubr.bf16.mxu0 0
    %544 = vmatmul.mubr.bf16.gmra.mrb[0].mxu0 %v478
    %v545 = vpop.f32.mrb[0].mxu0
    %v546 = vadd.f32 %v373, %v545
    %v547 = vpop.f32.mrb[0].mxu0
    %v548 = vpop.f32.mrb[0].mxu0
    %v549 = vadd.f32 %v378, %v548
    %v550 = vpop.f32.mrb[0].mxu0
    %551 = vmatprep.mubr.bf16.mxu0 0
    %552 = vmatmul.mubr.bf16.gmra.mrb[0].mxu0 %v481
    %v553 = vpop.f32.mrb[0].mxu0
    %v554 = vadd.f32 %v383, %v553
    %v555 = vpop.f32.mrb[0].mxu0
    %v556 = vpop.f32.mrb[0].mxu0
    %v557 = vadd.f32 %v388, %v556
    %v558 = vpop.f32.mrb[0].mxu0
    %559 = vmatprep.mubr.bf16.mxu0 0
    %560 = vmatmul.mubr.bf16.gmra.mrb[0].mxu0 %v484
    %v561 = vpop.f32.mrb[0].mxu0
    %v562 = vadd.f32 %v393, %v561
    %v563 = vpop.f32.mrb[0].mxu0
    %v564 = vpop.f32.mrb[0].mxu0
    %v565 = vadd.f32 %v398, %v564
    %v566 = vpop.f32.mrb[0].mxu0
    %567 = vmatprep.mubr.bf16.mxu0 0
    %568 = vmatmul.mubr.bf16.gmra.mrb[0].mxu0 %v487
    %v569 = vpop.f32.mrb[0].mxu0
    %v570 = vadd.f32 %v403, %v569
    %v571 = vpop.f32.mrb[0].mxu0
    %v572 = vpop.f32.mrb[0].mxu0
    %v573 = vadd.f32 %v408, %v572
    %v574 = vpop.f32.mrb[0].mxu0
    %575 = vmatprep.mubr.bf16.mxu0 0
    %576 = vmatmul.mubr.bf16.gmra.mrb[0].mxu0 %v490
    %v577 = vpop.f32.mrb[0].mxu0
    %v578 = vadd.f32 %v413, %v577
    %v579 = vpop.f32.mrb[0].mxu0
    %v580 = vpop.f32.mrb[0].mxu0
    %v581 = vadd.f32 %v418, %v580
    %v582 = vpop.f32.mrb[0].mxu0
    %583 = vmatprep.mubr.bf16.mxu0 0
    %584 = vmatmul.mubr.bf16.gmra.mrb[0].mxu0 %v493
    %v585 = vpop.f32.mrb[0].mxu0
    %v586 = vadd.f32 %v423, %v585
    %v587 = vpop.f32.mrb[0].mxu0
    %v588 = vpop.f32.mrb[0].mxu0
    %v589 = vadd.f32 %v428, %v588
    %v590 = vpop.f32.mrb[0].mxu0
    %591 = vdwg.mxu0
    %v592 = vmax.f32 %v530, 0.0
    %v593 = vmax.f32 %v533, 0.0
    %v594 = vmax.f32 %v538, 0.0
    %v595 = vmax.f32 %v541, 0.0
    %v596 = vmax.f32 %v546, 0.0
    %v597 = vmax.f32 %v549, 0.0
    %v598 = vmax.f32 %v554, 0.0
    %v599 = vmax.f32 %v557, 0.0
    %v600 = vmax.f32 %v562, 0.0
    %v601 = vmax.f32 %v565, 0.0
    %v602 = vmax.f32 %v570, 0.0
    %v603 = vmax.f32 %v573, 0.0
    %v604 = vmax.f32 %v578, 0.0
    %v605 = vmax.f32 %v581, 0.0
    %v606 = vmax.f32 %v586, 0.0
    %v607 = vmax.f32 %v589, 0.0
    %v608 = vpack.c.bf16 %v593, %v592
    %v609 = vpack.c.bf16 %v595, %v594
    %v610 = vpack.c.bf16 %v597, %v596
    %v611 = vpack.c.bf16 %v599, %v598
    %v612 = vpack.c.bf16 %v601, %v600
    %v613 = vpack.c.bf16 %v603, %v602
    %v614 = vpack.c.bf16 %v605, %v604
    %v615 = vpack.c.bf16 %v607, %v606
    %v616 = vld [vmem:[%s7] sm:$0xf]
    %v617 = vld [vmem:[%s7 + $0x4] sm:$0xf]
    %v618 = vld [vmem:[%s7 + $0x8] sm:$0xf]
    %v619 = vld [vmem:[%s7 + $0xc] sm:$0xf]
    %v620 = vld [vmem:[%s7 + $0x10] sm:$0xf]
    %v621 = vld [vmem:[%s7 + $0x14] sm:$0xf]
    %v622 = vld [vmem:[%s7 + $0x18] sm:$0xf]
    %v623 = vld [vmem:[%s7 + $0x1c] sm:$0xf]
    %v624 = vld [vmem:[%s8] sm:$0xff]
    %v625 = vld [vmem:[%s8 + $0x8] sm:$0xff]
    %v626 = vld [vmem:[%s8 + $0x10] sm:$0xff]
    %v627 = vld [vmem:[%s8 + $0x18] sm:$0xff]
    %v628 = vld [vmem:[%s8 + $0x20] sm:$0xff]
    %v629 = vld [vmem:[%s8 + $0x28] sm:$0xff]
    %v630 = vld [vmem:[%s8 + $0x30] sm:$0xff]
    %v631 = vld [vmem:[%s8 + $0x38] sm:$0xff]
    %633 = vset.pattern.permute.xlu0 0
    %634 = vperm.xlu0 %633, %v624
    %v635 = vpop.permute.xlu0 %634
    %638 = vset.pattern.permute.xlu0 0
    %639 = vperm.xlu0 %638, %v625
    %v640 = vpop.permute.xlu0 %639
    %643 = vset.pattern.permute.xlu0 0
    %644 = vperm.xlu0 %643, %v626
    %v645 = vpop.permute.xlu0 %644
    %648 = vset.pattern.permute.xlu0 0
    %649 = vperm.xlu0 %648, %v627
    %v650 = vpop.permute.xlu0 %649
    %653 = vset.pattern.permute.xlu0 0
    %654 = vperm.xlu0 %653, %v628
    %v655 = vpop.permute.xlu0 %654
    %658 = vset.pattern.permute.xlu0 0
    %659 = vperm.xlu0 %658, %v629
    %v660 = vpop.permute.xlu0 %659
    %663 = vset.pattern.permute.xlu0 0
    %664 = vperm.xlu0 %663, %v630
    %v665 = vpop.permute.xlu0 %664
    %668 = vset.pattern.permute.xlu0 0
    %669 = vperm.xlu0 %668, %v631
    %v670 = vpop.permute.xlu0 %669
    %v680 = vunpack.c.l.b16 %v616
    %v681 = vunpack.c.l.b16 %v617
    %v682 = vunpack.c.l.b16 %v618
    %v683 = vunpack.c.l.b16 %v619
    %v684 = vunpack.c.l.b16 %v620
    %v685 = vunpack.c.l.b16 %v621
    %v686 = vunpack.c.l.b16 %v622
    %v687 = vunpack.c.l.b16 %v623
    %v688 = vpack.c.b16 %v681, %v680
    %v689 = vpack.c.b16 %v683, %v682
    %v690 = vpack.c.b16 %v685, %v684
    %v691 = vpack.c.b16 %v687, %v686
    %696 = vmatprep.subr.bf16.mxu0 0
    %697 = vmatpush1.bf16.msra.mxu0 %v608
    %698 = vmatprep.subr.bf16.mxu0 0
    %699 = vmatpush1.bf16.msra.mxu0 %v609
    %700 = vmatprep.subr.bf16.mxu0 0
    %701 = vmatpush1.bf16.msra.mxu0 %v610
    %702 = vmatprep.subr.bf16.mxu0 0
    %703 = vmatpush1.bf16.msra.mxu0 %v611
    %704 = vmatprep.subr.bf16.mxu0 0
    %705 = vmatpush1.bf16.msra.mxu0 %v612
    %706 = vmatprep.subr.bf16.mxu0 0
    %707 = vmatpush1.bf16.msra.mxu0 %v613
    %708 = vmatprep.subr.bf16.mxu0 0
    %709 = vmatpush1.bf16.msra.mxu0 %v614
    %710 = vmatprep.subr.bf16.mxu0 0
    %711 = vmatpush1.bf16.msra.mxu0 %v615
    %712 = vmatprep.subr.bf16.mxu0 0
    %713 = vmatpush1.bf16.msra.mxu0 0
    %714 = vmatprep.subr.bf16.mxu0 0
    %715 = vmatpush1.bf16.msra.mxu0 0
    %716 = vmatprep.subr.bf16.mxu0 0
    %717 = vmatpush1.bf16.msra.mxu0 0
    %718 = vmatprep.subr.bf16.mxu0 0
    %719 = vmatpush1.bf16.msra.mxu0 0
    %720 = vmatprep.subr.bf16.mxu0 0
    %721 = vmatpush1.bf16.msra.mxu0 0
    %722 = vmatprep.subr.bf16.mxu0 0
    %723 = vmatpush1.bf16.msra.mxu0 0
    %724 = vmatprep.subr.bf16.mxu0 0
    %725 = vmatpush1.bf16.msra.mxu0 0
    %726 = vmatprep.subr.bf16.mxu0 0
    %727 = vmatpush1.bf16.msra.mxu0 0
    %728 = vmatprep.mubr.bf16.mxu0 0
    %729 = vmatmul.mubr.bf16.gmra.mrb[0].mxu0 %v688
    %v730 = vpop.f32.mrb[0].mxu0
    %v731 = vadd.f32 %v635, %v730
    %v732 = vpop.f32.mrb[0].mxu0
    %v733 = vpop.f32.mrb[0].mxu0
    %v734 = vadd.f32 %v640, %v733
    %v735 = vpop.f32.mrb[0].mxu0
    %736 = vmatprep.mubr.bf16.mxu0 0
    %737 = vmatmul.mubr.bf16.gmra.mrb[0].mxu0 %v689
    %v738 = vpop.f32.mrb[0].mxu0
    %v739 = vadd.f32 %v645, %v738
    %v740 = vpop.f32.mrb[0].mxu0
    %v741 = vpop.f32.mrb[0].mxu0
    %v742 = vadd.f32 %v650, %v741
    %v743 = vpop.f32.mrb[0].mxu0
    %744 = vmatprep.mubr.bf16.mxu0 0
    %745 = vmatmul.mubr.bf16.gmra.mrb[0].mxu0 %v690
    %v746 = vpop.f32.mrb[0].mxu0
    %v747 = vadd.f32 %v655, %v746
    %v748 = vpop.f32.mrb[0].mxu0
    %v749 = vpop.f32.mrb[0].mxu0
    %v750 = vadd.f32 %v660, %v749
    %v751 = vpop.f32.mrb[0].mxu0
    %752 = vmatprep.mubr.bf16.mxu0 0
    %753 = vmatmul.mubr.bf16.gmra.mrb[0].mxu0 %v691
    %v754 = vpop.f32.mrb[0].mxu0
    %v755 = vadd.f32 %v665, %v754
    %v756 = vpop.f32.mrb[0].mxu0
    %v757 = vpop.f32.mrb[0].mxu0
    %v758 = vadd.f32 %v670, %v757
    %v759 = vpop.f32.mrb[0].mxu0
    %760 = vdwg.mxu0
    %v761 = vmax.f32 %v731, 0.0
    %v762 = vmax.f32 %v734, 0.0
    %v763 = vmax.f32 %v739, 0.0
    %v764 = vmax.f32 %v742, 0.0
    %v765 = vmax.f32 %v747, 0.0
    %v766 = vmax.f32 %v750, 0.0
    %v767 = vmax.f32 %v755, 0.0
    %v768 = vmax.f32 %v758, 0.0
    %v769 = vpack.c.bf16 %v762, %v761
    %v770 = vpack.c.bf16 %v764, %v763
    %v771 = vpack.c.bf16 %v766, %v765
    %v772 = vpack.c.bf16 %v768, %v767
    %v773 = vld [vmem:[%s9] sm:$0xf]
    %v774 = vld [vmem:[%s9 + $0x4] sm:$0xf]
    %v775 = vld [vmem:[%s9 + $0x8] sm:$0xf]
    %v776 = vld [vmem:[%s9 + $0xc] sm:$0xf]
    %v777 = vld [vmem:[%s10] sm:$0xff]
    %v778 = vld [vmem:[%s10 + $0x8] sm:$0xff]
    %v779 = vld [vmem:[%s10 + $0x10] sm:$0xff]
    %v780 = vld [vmem:[%s10 + $0x18] sm:$0xff]
    %782 = vset.pattern.permute.xlu0 0
    %783 = vperm.xlu0 %782, %v777
    %v784 = vpop.permute.xlu0 %783
    %787 = vset.pattern.permute.xlu0 0
    %788 = vperm.xlu0 %787, %v778
    %v789 = vpop.permute.xlu0 %788
    %792 = vset.pattern.permute.xlu0 0
    %793 = vperm.xlu0 %792, %v779
    %v794 = vpop.permute.xlu0 %793
    %797 = vset.pattern.permute.xlu0 0
    %798 = vperm.xlu0 %797, %v780
    %v799 = vpop.permute.xlu0 %798
    %v805 = vunpack.c.l.b16 %v773
    %v806 = vunpack.c.l.b16 %v774
    %v807 = vunpack.c.l.b16 %v775
    %v808 = vunpack.c.l.b16 %v776
    %v809 = vpack.c.b16 %v806, %v805
    %v810 = vpack.c.b16 %v808, %v807
    %v812 = vsel %vm470, %v809, 0
    %v815 = vsel %vm470, %v810, 0
    %817 = vmatprep.subr.bf16.mxu0 0
    %818 = vmatpush1.bf16.msra.mxu0 %v769
    %819 = vmatprep.subr.bf16.mxu0 0
    %820 = vmatpush1.bf16.msra.mxu0 %v770
    %821 = vmatprep.subr.bf16.mxu0 0
    %822 = vmatpush1.bf16.msra.mxu0 %v771
    %823 = vmatprep.subr.bf16.mxu0 0
    %824 = vmatpush1.bf16.msra.mxu0 %v772
    %825 = vmatprep.subr.bf16.mxu0 0
    %826 = vmatpush1.bf16.msra.mxu0 0
    %827 = vmatprep.subr.bf16.mxu0 0
    %828 = vmatpush1.bf16.msra.mxu0 0
    %829 = vmatprep.subr.bf16.mxu0 0
    %830 = vmatpush1.bf16.msra.mxu0 0
    %831 = vmatprep.subr.bf16.mxu0 0
    %832 = vmatpush1.bf16.msra.mxu0 0
    %833 = vmatprep.subr.bf16.mxu0 0
    %834 = vmatpush1.bf16.msra.mxu0 0
    %835 = vmatprep.subr.bf16.mxu0 0
    %836 = vmatpush1.bf16.msra.mxu0 0
    %837 = vmatprep.subr.bf16.mxu0 0
    %838 = vmatpush1.bf16.msra.mxu0 0
    %839 = vmatprep.subr.bf16.mxu0 0
    %840 = vmatpush1.bf16.msra.mxu0 0
    %841 = vmatprep.subr.bf16.mxu0 0
    %842 = vmatpush1.bf16.msra.mxu0 0
    %843 = vmatprep.subr.bf16.mxu0 0
    %844 = vmatpush1.bf16.msra.mxu0 0
    %845 = vmatprep.subr.bf16.mxu0 0
    %846 = vmatpush1.bf16.msra.mxu0 0
    %847 = vmatprep.subr.bf16.mxu0 0
    %848 = vmatpush1.bf16.msra.mxu0 0
    %849 = vmatprep.mubr.bf16.mxu0 0
    %850 = vmatmul.mubr.bf16.gmra.mrb[0].mxu0 %v812
    %v851 = vpop.f32.mrb[0].mxu0
    %v852 = vadd.f32 %v784, %v851
    %v853 = vpop.f32.mrb[0].mxu0
    %v854 = vpop.f32.mrb[0].mxu0
    %v855 = vadd.f32 %v789, %v854
    %v856 = vpop.f32.mrb[0].mxu0
    %857 = vmatprep.mubr.bf16.mxu0 0
    %858 = vmatmul.mubr.bf16.gmra.mrb[0].mxu0 %v815
    %v859 = vpop.f32.mrb[0].mxu0
    %v860 = vadd.f32 %v794, %v859
    %v861 = vpop.f32.mrb[0].mxu0
    %v862 = vpop.f32.mrb[0].mxu0
    %v863 = vadd.f32 %v799, %v862
    %v864 = vpop.f32.mrb[0].mxu0
    %865 = vdwg.mxu0
    %v866 = vmax.f32 %v852, 0.0
    %v867 = vmax.f32 %v855, 0.0
    %v868 = vmax.f32 %v860, 0.0
    %v869 = vmax.f32 %v863, 0.0
    %v870 = vpack.c.bf16 %v867, %v866
    %v871 = vpack.c.bf16 %v869, %v868
    %v872 = vld [vmem:[%s11] sm:$0x3]
    %v873 = vld [vmem:[%s12] sm:$0x7]
    %875 = vset.pattern.permute.xlu0 0
    %876 = vperm.xlu0 %875, %v873
    %v877 = vpop.permute.xlu0 %876
    %v880 = vsel %vm228, %v872, 0
    %882 = vmatprep.subr.bf16.mxu0 0
    %883 = vmatpush1.bf16.msra.mxu0 %v870
    %884 = vmatprep.subr.bf16.mxu0 0
    %885 = vmatpush1.bf16.msra.mxu0 %v871
    %886 = vmatprep.subr.bf16.mxu0 0
    %887 = vmatpush1.bf16.msra.mxu0 0
    %888 = vmatprep.subr.bf16.mxu0 0
    %889 = vmatpush1.bf16.msra.mxu0 0
    %890 = vmatprep.subr.bf16.mxu0 0
    %891 = vmatpush1.bf16.msra.mxu0 0
    %892 = vmatprep.subr.bf16.mxu0 0
    %893 = vmatpush1.bf16.msra.mxu0 0
    %894 = vmatprep.subr.bf16.mxu0 0
    %895 = vmatpush1.bf16.msra.mxu0 0
    %896 = vmatprep.subr.bf16.mxu0 0
    %897 = vmatpush1.bf16.msra.mxu0 0
    %898 = vmatprep.subr.bf16.mxu0 0
    %899 = vmatpush1.bf16.msra.mxu0 0
    %900 = vmatprep.subr.bf16.mxu0 0
    %901 = vmatpush1.bf16.msra.mxu0 0
    %902 = vmatprep.subr.bf16.mxu0 0
    %903 = vmatpush1.bf16.msra.mxu0 0
    %904 = vmatprep.subr.bf16.mxu0 0
    %905 = vmatpush1.bf16.msra.mxu0 0
    %906 = vmatprep.subr.bf16.mxu0 0
    %907 = vmatpush1.bf16.msra.mxu0 0
    %908 = vmatprep.subr.bf16.mxu0 0
    %909 = vmatpush1.bf16.msra.mxu0 0
    %910 = vmatprep.subr.bf16.mxu0 0
    %911 = vmatpush1.bf16.msra.mxu0 0
    %912 = vmatprep.subr.bf16.mxu0 0
    %913 = vmatpush1.bf16.msra.mxu0 0
    %914 = vmatprep.mubr.bf16.mxu0 0
    %915 = vmatmul.mubr.bf16.gmra.mrb[0].mxu0 %v880
    %v916 = vpop.f32.mrb[0].mxu0
    %v917 = vadd.f32 %v877, %v916
    %v918 = vpop.f32.mrb[0].mxu0
    %v919 = vpop.f32.mrb[0].mxu0
    %v920 = vpop.f32.mrb[0].mxu0
    %921 = vdwg.mxu0
    %922 = vst [vmem:[#allocation2] sm:$0x7] %v917
    // Predicated region
    $region54: #{tpu_custom_call.1} parent=1 // pred_check
      _
    $region55: #{tpu_custom_call.1} parent=1 // pred_check_branch
      %924 = sbr.rel (0) target = $region57
    $region56: #{tpu_custom_call.1} parent=1 // pred_region
      %s926 = ssub.s32 64, 64
      %927 = vsyncadd [#allocation3], %s926
      %s929 = sshll.u32 [#allocation2], 4
      %s930 = int_to_ptr.vmem [resolvable:$true] %s929
      %932 = dma.vmem_to_hbm [thread:$0]  %s930, 64, %s13, [#allocation3]
    $region57: #{tpu_custom_call.1} parent=1 // pred_fallthru
      _
    // Predicated region
    $region58: #{tpu_custom_call.1} parent=1 // pred_check
      _
    $region59: #{tpu_custom_call.1} parent=1 // pred_check_branch
      %934 = sbr.rel (0) target = $region61
    $region60: #{tpu_custom_call.1} parent=1 // pred_region
      %935 = dma.done [#allocation3], 64
    $region61: #{tpu_custom_call.1} parent=1 // pred_fallthru
      _
    %936 = vsyncpa [#allocation3], 1

</llo_original>
